<compile_context>
chip_gen: v6e
topology: v6e:2x2x1
jax: 0.10.0
libtpu: 0.0.40
codegen_flags: <defaults>
</compile_context>

<pallas_src>
import functools

import jax
import jax.numpy as jnp
from jax.experimental import pallas as pl
from jax.experimental.pallas import tpu as pltpu

NUM_SHAPE_CLASSES = 16
NUM_COLOR_CLASSES = 8
SLAB_WIDTH = 128  # lane-dense packed output: [shape_logits | color_logits |
                  #  shape_sample, color_sample, log_prob, entropy | zero pad]


def _decoder_head(x, w1, b1, w2, b2, emb, gamma, beta):
    """One DiscreteDecoder on in-register values: MLP -> categorical stats ->
    argmax sample -> x = LayerNorm(x + Embedding[sample])."""
    h = jnp.maximum(jnp.dot(x, w1, preferred_element_type=jnp.float32) + b1, 0.0)
    logits = jnp.dot(h, w2, preferred_element_type=jnp.float32) + b2        # (B, K)

    # numerically-stable log-softmax stats
    m = jnp.max(logits, axis=-1, keepdims=True)
    z = logits - m
    ez = jnp.exp(z)
    se = jnp.sum(ez, axis=-1, keepdims=True)
    inv_se = pl.reciprocal(se, approx=True)              # EUP vrcp (free slot)
    log_softmax = z - jnp.log(se)
    probs = ez * inv_se

    # sample = argmax(logits), first max index  (sample_max=True path)
    # TODO(synk): stochastic Categorical.sample() (sample_max=False) would need
    # pltpu.prng_seed/prng_random_bits + Gumbel trick; not modeled here.
    K = logits.shape[-1]
    iota = jax.lax.broadcasted_iota(jnp.int32, logits.shape, 1)
    sample = jnp.min(jnp.where(logits >= m, iota, K), axis=-1, keepdims=True)  # (B,1) i32
    onehot = (iota == sample).astype(jnp.float32)

    logp = jnp.sum(onehot * log_softmax, axis=-1, keepdims=True)           # (B,1)
    ent = -jnp.sum(probs * log_softmax, axis=-1, keepdims=True)            # (B,1)

    # conditioning: LayerNorm(x + Embedding[sample]); one-hot matmul keeps the
    # embedding gather on the MXU.
    y = x + jnp.dot(onehot, emb, preferred_element_type=jnp.float32)       # (B, C)
    mu = jnp.mean(y, axis=-1, keepdims=True)
    var = jnp.mean(y * y, axis=-1, keepdims=True) - mu * mu                # single-pass LN
    xcond = (y - mu) * jax.lax.rsqrt(var + 1e-5) * gamma + beta
    return sample, logp, ent, xcond, logits


def insert_decoder_kernel(
        x_ref,
        sw1, sb1, sw2, sb2, semb, sg, sbt,        # shape head params
        cw1, cb1, cw2, cb2, cemb, cg, cbt,        # color head params
        xout_ref, slab_ref):
    x = x_ref[...]                                                         # (TB, C)

    ss, slp, sent, x, slog = _decoder_head(
        x, sw1[...], sb1[...], sw2[...], sb2[...], semb[...], sg[...], sbt[...])
    cs, clp, cent, x, clog = _decoder_head(
        x, cw1[...], cb1[...], cw2[...], cb2[...], cemb[...], cg[...], cbt[...])

    xout_ref[...] = x                                                      # (TB, C)

    ns, nc = slog.shape[-1], clog.shape[-1]
    pad = SLAB_WIDTH - (ns + nc + 4)
    slab_ref[...] = jnp.concatenate(
        [slog,                                   # [:, 0:ns]
         clog,                                   # [:, ns:ns+nc]
         ss.astype(jnp.float32),                 # [:, ns+nc]      shape sample
         cs.astype(jnp.float32),                 # [:, ns+nc+1]    color sample
         slp + clp,                              # [:, ns+nc+2]    total log_prob
         sent + cent,                            # [:, ns+nc+3]    total entropy
         jnp.zeros((x.shape[0], pad), jnp.float32)],
        axis=-1)                                                           # (TB, 128)


_PARAM_ORDER = ("w1", "b1", "w2", "b2", "emb", "gamma", "beta")


@functools.partial(jax.jit, static_argnames=("block_b",))
def insert_decoder_forward(x, shape_params, color_params, block_b=256):
    """InsertDecoder.forward with sample=None, sample_max=True, no equivalence.

    TODO(synk): equivalence-class logit pooling (shape_eq/color_eq) and the
    old_insert AutoDecoder path are not modeled.
    """
    B, C = x.shape
    NS = shape_params["w2"].shape[1]
    NC = color_params["w2"].shape[1]
    assert NS + NC + 4 <= SLAB_WIDTH

    TB = B if B <= block_b else block_b          # row tile (whole batch if small)
    grid = (pl.cdiv(B, TB),)

    def row_spec(width):
        return pl.BlockSpec((TB, width), lambda i: (i, 0))

    def const_spec(arr):                          # weights: resident across grid
        return pl.BlockSpec(arr.shape, lambda i: (0, 0))

    s_args = [shape_params[k] for k in _PARAM_ORDER]
    c_args = [color_params[k] for k in _PARAM_ORDER]

    xout, slab = pl.pallas_call(
        insert_decoder_kernel,
        out_shape=(jax.ShapeDtypeStruct((B, C), jnp.float32),
                   jax.ShapeDtypeStruct((B, SLAB_WIDTH), jnp.float32)),
        grid=grid,
        in_specs=[row_spec(C)] + [const_spec(a) for a in s_args + c_args],
        out_specs=(row_spec(C), row_spec(SLAB_WIDTH)),
        compiler_params=pltpu.CompilerParams(
            dimension_semantics=("parallel",)),   # shards rows across TCs on v7x
    )(x, *s_args, *c_args)

    slog = slab[:, :NS]
    clog = slab[:, NS:NS + NC]
    out_sample = slab[:, NS + NC:NS + NC + 2].astype(jnp.int32)            # (B, 2)
    log_prob = slab[:, NS + NC + 2]                                        # (B,)
    entropy = slab[:, NS + NC + 3]                                         # (B,)
    return out_sample, log_prob, entropy, xout, (slog, clog)


def init_decoder_params(key, channels, num_classes):
    k1, k2, k3, k4, k5 = jax.random.split(key, 5)
    scale1 = 1.0 / jnp.sqrt(channels)
    return {
        "w1": jax.random.normal(k1, (channels, channels), jnp.float32) * scale1,
        "b1": jax.random.normal(k2, (1, channels), jnp.float32) * 0.01,
        "w2": jax.random.normal(k3, (channels, num_classes), jnp.float32) * scale1,
        "b2": jax.random.normal(k4, (1, num_classes), jnp.float32) * 0.01,
        "emb": jax.random.normal(k5, (num_classes, channels), jnp.float32) * 0.02,
        "gamma": jnp.ones((1, channels), jnp.float32),
        "beta": jnp.zeros((1, channels), jnp.float32),
    }


if __name__ == "__main__":
    B, C = 8, 128   # small batch of decode-token features; C=128 keeps lanes full
    key = jax.random.PRNGKey(0)
    kx, ks, kc = jax.random.split(key, 3)

    x = jax.random.normal(kx, (B, C), jnp.float32)
    shape_params = init_decoder_params(ks, C, NUM_SHAPE_CLASSES)
    color_params = init_decoder_params(kc, C, NUM_COLOR_CLASSES)

    out_sample, log_prob, entropy, x_out, (slogits, clogits) = jax.block_until_ready(
        insert_decoder_forward(x, shape_params, color_params)
    )

    # pure-JAX reference of the same math (exact softmax / two-pass LayerNorm)
    def ref_decoder(x, p):
        h = jnp.maximum(x @ p["w1"] + p["b1"], 0.0)
        logits = h @ p["w2"] + p["b2"]
        ls = jax.nn.log_softmax(logits, axis=-1)
        sample = jnp.argmax(logits, axis=-1)
        lp = jnp.take_along_axis(ls, sample[:, None], axis=-1)[:, 0]
        ent = -jnp.sum(jnp.exp(ls) * ls, axis=-1)
        y = x + p["emb"][sample]
        mu = y.mean(-1, keepdims=True)
        var = ((y - mu) ** 2).mean(-1, keepdims=True)
        y = (y - mu) * jax.lax.rsqrt(var + 1e-5) * p["gamma"] + p["beta"]
        return sample, lp, ent, y, logits

    s1, lp1, e1, xr, sl = ref_decoder(x, shape_params)
    s2, lp2, e2, xr, cl = ref_decoder(xr, color_params)
    assert jnp.all(out_sample[:, 0] == s1) and jnp.all(out_sample[:, 1] == s2)
    assert jnp.allclose(log_prob, lp1 + lp2, atol=1e-4)
    # entropy uses the approx (EUP) reciprocal -> slightly looser tolerance
    assert jnp.allclose(entropy, e1 + e2, atol=1e-2, rtol=1e-3)
    assert jnp.allclose(x_out, xr, atol=5e-4)
    assert jnp.allclose(slogits, sl, atol=1e-4) and jnp.allclose(clogits, cl, atol=1e-4)

    print("KERNEL_OK")
</pallas_src>

<mosaic_0001>
module attributes {stable_mosaic.version = 11 : i64} {
  func.func @insert_decoder_kernel(%arg0: i32, %arg1: memref<8x128xf32, #tpu.memory_space<vmem>>, %arg2: memref<128x128xf32, #tpu.memory_space<vmem>>, %arg3: memref<1x128xf32, #tpu.memory_space<vmem>>, %arg4: memref<128x16xf32, #tpu.memory_space<vmem>>, %arg5: memref<1x16xf32, #tpu.memory_space<vmem>>, %arg6: memref<16x128xf32, #tpu.memory_space<vmem>>, %arg7: memref<1x128xf32, #tpu.memory_space<vmem>>, %arg8: memref<1x128xf32, #tpu.memory_space<vmem>>, %arg9: memref<128x128xf32, #tpu.memory_space<vmem>>, %arg10: memref<1x128xf32, #tpu.memory_space<vmem>>, %arg11: memref<128x8xf32, #tpu.memory_space<vmem>>, %arg12: memref<1x8xf32, #tpu.memory_space<vmem>>, %arg13: memref<8x128xf32, #tpu.memory_space<vmem>>, %arg14: memref<1x128xf32, #tpu.memory_space<vmem>>, %arg15: memref<1x128xf32, #tpu.memory_space<vmem>>, %arg16: memref<8x128xf32, #tpu.memory_space<vmem>>, %arg17: memref<8x128xf32, #tpu.memory_space<vmem>>) attributes {dimension_semantics = [#tpu.dimension_semantics<parallel>], iteration_bounds = array<i64: 1>, scalar_prefetch = 0 : i64, scratch_operands = 0 : i64, tpu.core_type = #tpu.core_type<tc>, window_params = [{transform_indices = @transform_0, window_bounds = array<i64: 8, 128>}, {pipeline_mode = #tpu.pipeline_mode<synchronous>, transform_indices = @transform_1, window_bounds = array<i64: 128, 128>}, {pipeline_mode = #tpu.pipeline_mode<synchronous>, transform_indices = @transform_2, window_bounds = array<i64: 1, 128>}, {pipeline_mode = #tpu.pipeline_mode<synchronous>, transform_indices = @transform_3, window_bounds = array<i64: 128, 16>}, {pipeline_mode = #tpu.pipeline_mode<synchronous>, transform_indices = @transform_4, window_bounds = array<i64: 1, 16>}, {pipeline_mode = #tpu.pipeline_mode<synchronous>, transform_indices = @transform_5, window_bounds = array<i64: 16, 128>}, {pipeline_mode = #tpu.pipeline_mode<synchronous>, transform_indices = @transform_6, window_bounds = array<i64: 1, 128>}, {pipeline_mode = #tpu.pipeline_mode<synchronous>, transform_indices = @transform_7, window_bounds = array<i64: 1, 128>}, {pipeline_mode = #tpu.pipeline_mode<synchronous>, transform_indices = @transform_8, window_bounds = array<i64: 128, 128>}, {pipeline_mode = #tpu.pipeline_mode<synchronous>, transform_indices = @transform_9, window_bounds = array<i64: 1, 128>}, {pipeline_mode = #tpu.pipeline_mode<synchronous>, transform_indices = @transform_10, window_bounds = array<i64: 128, 8>}, {pipeline_mode = #tpu.pipeline_mode<synchronous>, transform_indices = @transform_11, window_bounds = array<i64: 1, 8>}, {pipeline_mode = #tpu.pipeline_mode<synchronous>, transform_indices = @transform_12, window_bounds = array<i64: 8, 128>}, {pipeline_mode = #tpu.pipeline_mode<synchronous>, transform_indices = @transform_13, window_bounds = array<i64: 1, 128>}, {pipeline_mode = #tpu.pipeline_mode<synchronous>, transform_indices = @transform_14, window_bounds = array<i64: 1, 128>}, {transform_indices = @transform_15, window_bounds = array<i64: 8, 128>}, {transform_indices = @transform_16, window_bounds = array<i64: 8, 128>}]} {
    %c0 = arith.constant 0 : index
    %c0_0 = arith.constant 0 : index
    %0 = vector.load %arg1[%c0, %c0_0] : memref<8x128xf32, #tpu.memory_space<vmem>>, vector<8x128xf32>
    %c0_1 = arith.constant 0 : index
    %c0_2 = arith.constant 0 : index
    %1 = vector.load %arg2[%c0_1, %c0_2] : memref<128x128xf32, #tpu.memory_space<vmem>>, vector<128x128xf32>
    %c0_3 = arith.constant 0 : index
    %c0_4 = arith.constant 0 : index
    %2 = vector.load %arg3[%c0_3, %c0_4] : memref<1x128xf32, #tpu.memory_space<vmem>>, vector<1x128xf32>
    %c0_5 = arith.constant 0 : index
    %c0_6 = arith.constant 0 : index
    %3 = vector.load %arg4[%c0_5, %c0_6] : memref<128x16xf32, #tpu.memory_space<vmem>>, vector<128x16xf32>
    %c0_7 = arith.constant 0 : index
    %c0_8 = arith.constant 0 : index
    %4 = vector.load %arg5[%c0_7, %c0_8] : memref<1x16xf32, #tpu.memory_space<vmem>>, vector<1x16xf32>
    %c0_9 = arith.constant 0 : index
    %c0_10 = arith.constant 0 : index
    %5 = vector.load %arg6[%c0_9, %c0_10] : memref<16x128xf32, #tpu.memory_space<vmem>>, vector<16x128xf32>
    %c0_11 = arith.constant 0 : index
    %c0_12 = arith.constant 0 : index
    %6 = vector.load %arg7[%c0_11, %c0_12] : memref<1x128xf32, #tpu.memory_space<vmem>>, vector<1x128xf32>
    %c0_13 = arith.constant 0 : index
    %c0_14 = arith.constant 0 : index
    %7 = vector.load %arg8[%c0_13, %c0_14] : memref<1x128xf32, #tpu.memory_space<vmem>>, vector<1x128xf32>
    %cst = arith.constant dense<0.000000e+00> : vector<8x128xf32>
    %8 = tpu.matmul %0, %1, %cst {dimension_numbers = #tpu.dot_dimension_numbers<[1], [0], [0], [1], [0, 0, 1, 1], [], []>} : vector<8x128xf32>, vector<128x128xf32>, vector<8x128xf32> -> vector<8x128xf32>
    %9 = vector.broadcast %2 : vector<1x128xf32> to vector<8x128xf32>
    %10 = arith.addf %8, %9 : vector<8x128xf32>
    %cst_15 = arith.constant 0.000000e+00 : f32
    %11 = vector.broadcast %cst_15 : f32 to vector<8x128xf32>
    %12 = arith.maximumf %10, %11 : vector<8x128xf32>
    %cst_16 = arith.constant dense<0.000000e+00> : vector<8x16xf32>
    %13 = tpu.matmul %12, %3, %cst_16 {dimension_numbers = #tpu.dot_dimension_numbers<[1], [0], [0], [1], [0, 0, 1, 1], [], []>} : vector<8x128xf32>, vector<128x16xf32>, vector<8x16xf32> -> vector<8x16xf32>
    %14 = vector.broadcast %4 : vector<1x16xf32> to vector<8x16xf32>
    %15 = arith.addf %13, %14 : vector<8x16xf32>
    %cst_17 = arith.constant dense<0xFF800000> : vector<8xf32>
    %16 = vector.multi_reduction <maximumf>, %15, %cst_17 [1] : vector<8x16xf32> to vector<8xf32>
    %17 = vector.shape_cast %16 : vector<8xf32> to vector<8x1xf32>
    %18 = vector.broadcast %17 : vector<8x1xf32> to vector<8x16xf32>
    %19 = arith.subf %15, %18 : vector<8x16xf32>
    %20 = math.exp %19 : vector<8x16xf32>
    %cst_18 = arith.constant dense<0.000000e+00> : vector<8xf32>
    %21 = vector.multi_reduction <add>, %20, %cst_18 [1] : vector<8x16xf32> to vector<8xf32>
    %22 = vector.shape_cast %21 : vector<8xf32> to vector<8x1xf32>
    %23 = tpu.reciprocal %22 {approx = true} : vector<8x1xf32> -> vector<8x1xf32>
    %24 = math.log %22 : vector<8x1xf32>
    %25 = vector.broadcast %24 : vector<8x1xf32> to vector<8x16xf32>
    %26 = arith.subf %19, %25 : vector<8x16xf32>
    %27 = vector.broadcast %23 : vector<8x1xf32> to vector<8x16xf32>
    %28 = arith.mulf %20, %27 : vector<8x16xf32>
    %29 = tpu.iota {dimensions = array<i32: 1>} : vector<8x16xi32>
    %30 = vector.broadcast %17 : vector<8x1xf32> to vector<8x16xf32>
    %31 = arith.cmpf oge, %15, %30 : vector<8x16xf32>
    %c16_i32 = arith.constant 16 : i32
    %32 = vector.broadcast %c16_i32 : i32 to vector<8x16xi32>
    %33 = arith.select %31, %29, %32 : vector<8x16xi1>, vector<8x16xi32>
    %cst_19 = arith.constant dense<2147483647> : vector<8xi32>
    %34 = vector.multi_reduction <minsi>, %33, %cst_19 [1] : vector<8x16xi32> to vector<8xi32>
    %35 = vector.shape_cast %34 : vector<8xi32> to vector<8x1xi32>
    %36 = vector.broadcast %35 : vector<8x1xi32> to vector<8x16xi32>
    %37 = arith.cmpi eq, %29, %36 : vector<8x16xi32>
    %38 = arith.extui %37 : vector<8x16xi1> to vector<8x16xi32>
    %39 = arith.sitofp %38 : vector<8x16xi32> to vector<8x16xf32>
    %40 = arith.mulf %39, %26 : vector<8x16xf32>
    %cst_20 = arith.constant dense<0.000000e+00> : vector<8xf32>
    %41 = vector.multi_reduction <add>, %40, %cst_20 [1] : vector<8x16xf32> to vector<8xf32>
    %42 = vector.shape_cast %41 : vector<8xf32> to vector<8x1xf32>
    %43 = arith.mulf %28, %26 : vector<8x16xf32>
    %cst_21 = arith.constant dense<0.000000e+00> : vector<8xf32>
    %44 = vector.multi_reduction <add>, %43, %cst_21 [1] : vector<8x16xf32> to vector<8xf32>
    %45 = vector.shape_cast %44 : vector<8xf32> to vector<8x1xf32>
    %cst_22 = arith.constant 0.000000e+00 : f32
    %46 = vector.broadcast %cst_22 : f32 to vector<8x1xf32>
    %47 = arith.subf %46, %45 : vector<8x1xf32>
    %cst_23 = arith.constant dense<0.000000e+00> : vector<8x128xf32>
    %48 = tpu.matmul %39, %5, %cst_23 {dimension_numbers = #tpu.dot_dimension_numbers<[1], [0], [0], [1], [0, 0, 1, 1], [], []>} : vector<8x16xf32>, vector<16x128xf32>, vector<8x128xf32> -> vector<8x128xf32>
    %49 = arith.addf %0, %48 : vector<8x128xf32>
    %cst_24 = arith.constant dense<0.000000e+00> : vector<8xf32>
    %50 = vector.multi_reduction <add>, %49, %cst_24 [1] : vector<8x128xf32> to vector<8xf32>
    %51 = vector.shape_cast %50 : vector<8xf32> to vector<8x1xf32>
    %cst_25 = arith.constant 1.280000e+02 : f32
    %52 = vector.broadcast %cst_25 : f32 to vector<8x1xf32>
    %53 = arith.divf %51, %52 : vector<8x1xf32>
    %54 = arith.mulf %49, %49 : vector<8x128xf32>
    %cst_26 = arith.constant dense<0.000000e+00> : vector<8xf32>
    %55 = vector.multi_reduction <add>, %54, %cst_26 [1] : vector<8x128xf32> to vector<8xf32>
    %56 = vector.shape_cast %55 : vector<8xf32> to vector<8x1xf32>
    %cst_27 = arith.constant 1.280000e+02 : f32
    %57 = vector.broadcast %cst_27 : f32 to vector<8x1xf32>
    %58 = arith.divf %56, %57 : vector<8x1xf32>
    %59 = arith.mulf %53, %53 : vector<8x1xf32>
    %60 = arith.subf %58, %59 : vector<8x1xf32>
    %61 = vector.broadcast %53 : vector<8x1xf32> to vector<8x128xf32>
    %62 = arith.subf %49, %61 : vector<8x128xf32>
    %cst_28 = arith.constant 9.99999974E-6 : f32
    %63 = vector.broadcast %cst_28 : f32 to vector<8x1xf32>
    %64 = arith.addf %60, %63 : vector<8x1xf32>
    %65 = math.rsqrt %64 : vector<8x1xf32>
    %66 = vector.broadcast %65 : vector<8x1xf32> to vector<8x128xf32>
    %67 = arith.mulf %62, %66 : vector<8x128xf32>
    %68 = vector.broadcast %6 : vector<1x128xf32> to vector<8x128xf32>
    %69 = arith.mulf %67, %68 : vector<8x128xf32>
    %70 = vector.broadcast %7 : vector<1x128xf32> to vector<8x128xf32>
    %71 = arith.addf %69, %70 : vector<8x128xf32>
    %c0_29 = arith.constant 0 : index
    %c0_30 = arith.constant 0 : index
    %72 = vector.load %arg9[%c0_29, %c0_30] : memref<128x128xf32, #tpu.memory_space<vmem>>, vector<128x128xf32>
    %c0_31 = arith.constant 0 : index
    %c0_32 = arith.constant 0 : index
    %73 = vector.load %arg10[%c0_31, %c0_32] : memref<1x128xf32, #tpu.memory_space<vmem>>, vector<1x128xf32>
    %c0_33 = arith.constant 0 : index
    %c0_34 = arith.constant 0 : index
    %74 = vector.load %arg11[%c0_33, %c0_34] : memref<128x8xf32, #tpu.memory_space<vmem>>, vector<128x8xf32>
    %c0_35 = arith.constant 0 : index
    %c0_36 = arith.constant 0 : index
    %75 = vector.load %arg12[%c0_35, %c0_36] : memref<1x8xf32, #tpu.memory_space<vmem>>, vector<1x8xf32>
    %c0_37 = arith.constant 0 : index
    %c0_38 = arith.constant 0 : index
    %76 = vector.load %arg13[%c0_37, %c0_38] : memref<8x128xf32, #tpu.memory_space<vmem>>, vector<8x128xf32>
    %c0_39 = arith.constant 0 : index
    %c0_40 = arith.constant 0 : index
    %77 = vector.load %arg14[%c0_39, %c0_40] : memref<1x128xf32, #tpu.memory_space<vmem>>, vector<1x128xf32>
    %c0_41 = arith.constant 0 : index
    %c0_42 = arith.constant 0 : index
    %78 = vector.load %arg15[%c0_41, %c0_42] : memref<1x128xf32, #tpu.memory_space<vmem>>, vector<1x128xf32>
    %cst_43 = arith.constant dense<0.000000e+00> : vector<8x128xf32>
    %79 = tpu.matmul %71, %72, %cst_43 {dimension_numbers = #tpu.dot_dimension_numbers<[1], [0], [0], [1], [0, 0, 1, 1], [], []>} : vector<8x128xf32>, vector<128x128xf32>, vector<8x128xf32> -> vector<8x128xf32>
    %80 = vector.broadcast %73 : vector<1x128xf32> to vector<8x128xf32>
    %81 = arith.addf %79, %80 : vector<8x128xf32>
    %cst_44 = arith.constant 0.000000e+00 : f32
    %82 = vector.broadcast %cst_44 : f32 to vector<8x128xf32>
    %83 = arith.maximumf %81, %82 : vector<8x128xf32>
    %cst_45 = arith.constant dense<0.000000e+00> : vector<8x8xf32>
    %84 = tpu.matmul %83, %74, %cst_45 {dimension_numbers = #tpu.dot_dimension_numbers<[1], [0], [0], [1], [0, 0, 1, 1], [], []>} : vector<8x128xf32>, vector<128x8xf32>, vector<8x8xf32> -> vector<8x8xf32>
    %85 = vector.broadcast %75 : vector<1x8xf32> to vector<8x8xf32>
    %86 = arith.addf %84, %85 : vector<8x8xf32>
    %cst_46 = arith.constant dense<0xFF800000> : vector<8xf32>
    %87 = vector.multi_reduction <maximumf>, %86, %cst_46 [1] : vector<8x8xf32> to vector<8xf32>
    %88 = vector.shape_cast %87 : vector<8xf32> to vector<8x1xf32>
    %89 = vector.broadcast %88 : vector<8x1xf32> to vector<8x8xf32>
    %90 = arith.subf %86, %89 : vector<8x8xf32>
    %91 = math.exp %90 : vector<8x8xf32>
    %cst_47 = arith.constant dense<0.000000e+00> : vector<8xf32>
    %92 = vector.multi_reduction <add>, %91, %cst_47 [1] : vector<8x8xf32> to vector<8xf32>
    %93 = vector.shape_cast %92 : vector<8xf32> to vector<8x1xf32>
    %94 = tpu.reciprocal %93 {approx = true} : vector<8x1xf32> -> vector<8x1xf32>
    %95 = math.log %93 : vector<8x1xf32>
    %96 = vector.broadcast %95 : vector<8x1xf32> to vector<8x8xf32>
    %97 = arith.subf %90, %96 : vector<8x8xf32>
    %98 = vector.broadcast %94 : vector<8x1xf32> to vector<8x8xf32>
    %99 = arith.mulf %91, %98 : vector<8x8xf32>
    %100 = tpu.iota {dimensions = array<i32: 1>} : vector<8x8xi32>
    %101 = vector.broadcast %88 : vector<8x1xf32> to vector<8x8xf32>
    %102 = arith.cmpf oge, %86, %101 : vector<8x8xf32>
    %c8_i32 = arith.constant 8 : i32
    %103 = vector.broadcast %c8_i32 : i32 to vector<8x8xi32>
    %104 = arith.select %102, %100, %103 : vector<8x8xi1>, vector<8x8xi32>
    %cst_48 = arith.constant dense<2147483647> : vector<8xi32>
    %105 = vector.multi_reduction <minsi>, %104, %cst_48 [1] : vector<8x8xi32> to vector<8xi32>
    %106 = vector.shape_cast %105 : vector<8xi32> to vector<8x1xi32>
    %107 = vector.broadcast %106 : vector<8x1xi32> to vector<8x8xi32>
    %108 = arith.cmpi eq, %100, %107 : vector<8x8xi32>
    %109 = arith.extui %108 : vector<8x8xi1> to vector<8x8xi32>
    %110 = arith.sitofp %109 : vector<8x8xi32> to vector<8x8xf32>
    %111 = arith.mulf %110, %97 : vector<8x8xf32>
    %cst_49 = arith.constant dense<0.000000e+00> : vector<8xf32>
    %112 = vector.multi_reduction <add>, %111, %cst_49 [1] : vector<8x8xf32> to vector<8xf32>
    %113 = vector.shape_cast %112 : vector<8xf32> to vector<8x1xf32>
    %114 = arith.mulf %99, %97 : vector<8x8xf32>
    %cst_50 = arith.constant dense<0.000000e+00> : vector<8xf32>
    %115 = vector.multi_reduction <add>, %114, %cst_50 [1] : vector<8x8xf32> to vector<8xf32>
    %116 = vector.shape_cast %115 : vector<8xf32> to vector<8x1xf32>
    %cst_51 = arith.constant 0.000000e+00 : f32
    %117 = vector.broadcast %cst_51 : f32 to vector<8x1xf32>
    %118 = arith.subf %117, %116 : vector<8x1xf32>
    %cst_52 = arith.constant dense<0.000000e+00> : vector<8x128xf32>
    %119 = tpu.matmul %110, %76, %cst_52 {dimension_numbers = #tpu.dot_dimension_numbers<[1], [0], [0], [1], [0, 0, 1, 1], [], []>} : vector<8x8xf32>, vector<8x128xf32>, vector<8x128xf32> -> vector<8x128xf32>
    %120 = arith.addf %71, %119 : vector<8x128xf32>
    %cst_53 = arith.constant dense<0.000000e+00> : vector<8xf32>
    %121 = vector.multi_reduction <add>, %120, %cst_53 [1] : vector<8x128xf32> to vector<8xf32>
    %122 = vector.shape_cast %121 : vector<8xf32> to vector<8x1xf32>
    %cst_54 = arith.constant 1.280000e+02 : f32
    %123 = vector.broadcast %cst_54 : f32 to vector<8x1xf32>
    %124 = arith.divf %122, %123 : vector<8x1xf32>
    %125 = arith.mulf %120, %120 : vector<8x128xf32>
    %cst_55 = arith.constant dense<0.000000e+00> : vector<8xf32>
    %126 = vector.multi_reduction <add>, %125, %cst_55 [1] : vector<8x128xf32> to vector<8xf32>
    %127 = vector.shape_cast %126 : vector<8xf32> to vector<8x1xf32>
    %cst_56 = arith.constant 1.280000e+02 : f32
    %128 = vector.broadcast %cst_56 : f32 to vector<8x1xf32>
    %129 = arith.divf %127, %128 : vector<8x1xf32>
    %130 = arith.mulf %124, %124 : vector<8x1xf32>
    %131 = arith.subf %129, %130 : vector<8x1xf32>
    %132 = vector.broadcast %124 : vector<8x1xf32> to vector<8x128xf32>
    %133 = arith.subf %120, %132 : vector<8x128xf32>
    %cst_57 = arith.constant 9.99999974E-6 : f32
    %134 = vector.broadcast %cst_57 : f32 to vector<8x1xf32>
    %135 = arith.addf %131, %134 : vector<8x1xf32>
    %136 = math.rsqrt %135 : vector<8x1xf32>
    %137 = vector.broadcast %136 : vector<8x1xf32> to vector<8x128xf32>
    %138 = arith.mulf %133, %137 : vector<8x128xf32>
    %139 = vector.broadcast %77 : vector<1x128xf32> to vector<8x128xf32>
    %140 = arith.mulf %138, %139 : vector<8x128xf32>
    %141 = vector.broadcast %78 : vector<1x128xf32> to vector<8x128xf32>
    %142 = arith.addf %140, %141 : vector<8x128xf32>
    %c0_58 = arith.constant 0 : index
    %c0_59 = arith.constant 0 : index
    %143 = vector.load %arg16[%c0_58, %c0_59] : memref<8x128xf32, #tpu.memory_space<vmem>>, vector<8x128xf32>
    tpu.vector_store %arg16[%c0_58, %c0_59], %142 {strides = array<i32>} : memref<8x128xf32, #tpu.memory_space<vmem>>, vector<8x128xf32>,
    %144 = arith.sitofp %35 : vector<8x1xi32> to vector<8x1xf32>
    %145 = arith.sitofp %106 : vector<8x1xi32> to vector<8x1xf32>
    %146 = arith.addf %42, %113 : vector<8x1xf32>
    %147 = arith.addf %47, %118 : vector<8x1xf32>
    %cst_60 = arith.constant 0.000000e+00 : f32
    %148 = vector.broadcast %cst_60 : f32 to vector<8x100xf32>
    %149 = tpu.concatenate %15, %86, %144, %145, %146, %147, %148 in 1 : vector<8x16xf32>, vector<8x8xf32>, vector<8x1xf32>, vector<8x1xf32>, vector<8x1xf32>, vector<8x1xf32>, vector<8x100xf32> -> vector<8x128xf32>
    %c0_61 = arith.constant 0 : index
    %c0_62 = arith.constant 0 : index
    %150 = vector.load %arg17[%c0_61, %c0_62] : memref<8x128xf32, #tpu.memory_space<vmem>>, vector<8x128xf32>
    tpu.vector_store %arg17[%c0_61, %c0_62], %149 {strides = array<i32>} : memref<8x128xf32, #tpu.memory_space<vmem>>, vector<8x128xf32>,
    return
  }
  func.func @transform_0(%arg0: i32) -> (i32, i32) {
    %c0_i32 = arith.constant 0 : i32
    %c0_i32_0 = arith.constant 0 : i32
    return %arg0, %c0_i32 : i32, i32
  }
  func.func @transform_1(%arg0: i32) -> (i32, i32) {
    %c0_i32 = arith.constant 0 : i32
    %c0_i32_0 = arith.constant 0 : i32
    %c0_i32_1 = arith.constant 0 : i32
    return %c0_i32, %c0_i32_0 : i32, i32
  }
  func.func @transform_2(%arg0: i32) -> (i32, i32) {
    %c0_i32 = arith.constant 0 : i32
    %c0_i32_0 = arith.constant 0 : i32
    %c0_i32_1 = arith.constant 0 : i32
    return %c0_i32, %c0_i32_0 : i32, i32
  }
  func.func @transform_3(%arg0: i32) -> (i32, i32) {
    %c0_i32 = arith.constant 0 : i32
    %c0_i32_0 = arith.constant 0 : i32
    %c0_i32_1 = arith.constant 0 : i32
    return %c0_i32, %c0_i32_0 : i32, i32
  }
  func.func @transform_4(%arg0: i32) -> (i32, i32) {
    %c0_i32 = arith.constant 0 : i32
    %c0_i32_0 = arith.constant 0 : i32
    %c0_i32_1 = arith.constant 0 : i32
    return %c0_i32, %c0_i32_0 : i32, i32
  }
  func.func @transform_5(%arg0: i32) -> (i32, i32) {
    %c0_i32 = arith.constant 0 : i32
    %c0_i32_0 = arith.constant 0 : i32
    %c0_i32_1 = arith.constant 0 : i32
    return %c0_i32, %c0_i32_0 : i32, i32
  }
  func.func @transform_6(%arg0: i32) -> (i32, i32) {
    %c0_i32 = arith.constant 0 : i32
    %c0_i32_0 = arith.constant 0 : i32
    %c0_i32_1 = arith.constant 0 : i32
    return %c0_i32, %c0_i32_0 : i32, i32
  }
  func.func @transform_7(%arg0: i32) -> (i32, i32) {
    %c0_i32 = arith.constant 0 : i32
    %c0_i32_0 = arith.constant 0 : i32
    %c0_i32_1 = arith.constant 0 : i32
    return %c0_i32, %c0_i32_0 : i32, i32
  }
  func.func @transform_8(%arg0: i32) -> (i32, i32) {
    %c0_i32 = arith.constant 0 : i32
    %c0_i32_0 = arith.constant 0 : i32
    %c0_i32_1 = arith.constant 0 : i32
    return %c0_i32, %c0_i32_0 : i32, i32
  }
  func.func @transform_9(%arg0: i32) -> (i32, i32) {
    %c0_i32 = arith.constant 0 : i32
    %c0_i32_0 = arith.constant 0 : i32
    %c0_i32_1 = arith.constant 0 : i32
    return %c0_i32, %c0_i32_0 : i32, i32
  }
  func.func @transform_10(%arg0: i32) -> (i32, i32) {
    %c0_i32 = arith.constant 0 : i32
    %c0_i32_0 = arith.constant 0 : i32
    %c0_i32_1 = arith.constant 0 : i32
    return %c0_i32, %c0_i32_0 : i32, i32
  }
  func.func @transform_11(%arg0: i32) -> (i32, i32) {
    %c0_i32 = arith.constant 0 : i32
    %c0_i32_0 = arith.constant 0 : i32
    %c0_i32_1 = arith.constant 0 : i32
    return %c0_i32, %c0_i32_0 : i32, i32
  }
  func.func @transform_12(%arg0: i32) -> (i32, i32) {
    %c0_i32 = arith.constant 0 : i32
    %c0_i32_0 = arith.constant 0 : i32
    %c0_i32_1 = arith.constant 0 : i32
    return %c0_i32, %c0_i32_0 : i32, i32
  }
  func.func @transform_13(%arg0: i32) -> (i32, i32) {
    %c0_i32 = arith.constant 0 : i32
    %c0_i32_0 = arith.constant 0 : i32
    %c0_i32_1 = arith.constant 0 : i32
    return %c0_i32, %c0_i32_0 : i32, i32
  }
  func.func @transform_14(%arg0: i32) -> (i32, i32) {
    %c0_i32 = arith.constant 0 : i32
    %c0_i32_0 = arith.constant 0 : i32
    %c0_i32_1 = arith.constant 0 : i32
    return %c0_i32, %c0_i32_0 : i32, i32
  }
  func.func @transform_15(%arg0: i32) -> (i32, i32) {
    %c0_i32 = arith.constant 0 : i32
    %c0_i32_0 = arith.constant 0 : i32
    return %arg0, %c0_i32 : i32, i32
  }
  func.func @transform_16(%arg0: i32) -> (i32, i32) {
    %c0_i32 = arith.constant 0 : i32
    %c0_i32_0 = arith.constant 0 : i32
    return %arg0, %c0_i32 : i32, i32
  }
}

</mosaic_0001>

<llo_original>
// kernel: insert_decoder_forward.1
$region0: #{insert_decoder_forward.1}
  #allocation0 [shape = 'u32[]', space=smem, size = 0x4, offset = 0x4, fixed_abs, tag = 'smem constant byte address 0x4 - core index']
  #allocation1 [shape = 'u32[144,128]{1,0:T(1,128)}', space=vmem, size = 0x12000, scoped, tag = 'internal scratch']
  %s0 = inlined_call_operand.hbm [shape: f32[8,128], index: 0, kind: input, shape index: {}]
  %s1 = inlined_call_operand.vmem [shape: f32[128,128], index: 1, kind: input, shape index: {}]
  %s2 = inlined_call_operand.vmem [shape: f32[1,128], index: 2, kind: input, shape index: {}]
  %s3 = inlined_call_operand.vmem [shape: f32[128,16], index: 3, kind: input, shape index: {}]
  %s4 = inlined_call_operand.vmem [shape: f32[1,16], index: 4, kind: input, shape index: {}]
  %s5 = inlined_call_operand.vmem [shape: f32[16,128], index: 5, kind: input, shape index: {}]
  %s6 = inlined_call_operand.hbm [shape: f32[1,128], index: 6, kind: input, shape index: {}]
  %s7 = inlined_call_operand.hbm [shape: f32[1,128], index: 7, kind: input, shape index: {}]
  %s8 = inlined_call_operand.vmem [shape: f32[128,128], index: 8, kind: input, shape index: {}]
  %s9 = inlined_call_operand.vmem [shape: f32[1,128], index: 9, kind: input, shape index: {}]
  %s10 = inlined_call_operand.vmem [shape: f32[128,8], index: 10, kind: input, shape index: {}]
  %s11 = inlined_call_operand.vmem [shape: f32[1,8], index: 11, kind: input, shape index: {}]
  %s12 = inlined_call_operand.vmem [shape: f32[8,128], index: 12, kind: input, shape index: {}]
  %s13 = inlined_call_operand.vmem [shape: f32[1,128], index: 13, kind: input, shape index: {}]
  %s14 = inlined_call_operand.vmem [shape: f32[1,128], index: 14, kind: input, shape index: {}]
  %s15 = inlined_call_operand.hbm [shape: f32[8,128], index: 15, kind: output, shape index: {0}]
  %s16 = inlined_call_operand.vmem [shape: f32[8,128], index: 16, kind: output, shape index: {1}]
  %17 = xla_tuple %s15, %s16
  %s18 = sld [smem:[#allocation0]]
  $region90: #{insert_decoder_forward.1} parent=0
    _
  %s20 = ssub.s32 1, %s18
  %s21 = scalar_select 0, %s20, %s18
  $region1: #{insert_decoder_forward.1} parent=0
    #allocation2 [shape = 'u8[4096]{0}', space=vmem, size = 0x1000, scoped, tag = 'input window, operand 0, single buffered']
    #allocation3 [shape = 's32[1]{0}', space=sflag, size = 0x4, scoped, tag = 'scoped memory for insert_decoder_forward.1']
    #allocation4 [shape = 's32[1]{0}', space=sflag, size = 0x4, scoped, tag = 'scoped memory for insert_decoder_forward.1']
    #allocation5 [shape = 'u8[512]{0}', space=vmem, size = 0x400, scoped, tag = 'input window, operand 6, single buffered']
    #allocation6 [shape = 's32[1]{0}', space=sflag, size = 0x4, scoped, tag = 'scoped memory for insert_decoder_forward.1']
    #allocation7 [shape = 'u8[512]{0}', space=vmem, size = 0x400, scoped, tag = 'input window, operand 7, single buffered']
    #allocation8 [shape = 'u8[4096]{0}', space=vmem, size = 0x1000, scoped, tag = 'output window, operand 0, single buffered']
    %22 = vsyncpa [#allocation3], 0
    %23 = vsyncpa [#allocation6], 0
    %24 = vsyncpa [#allocation4], 0
    // Predicated region
    $region2: #{insert_decoder_forward.1} parent=1 // pred_check
      _
    $region3: #{insert_decoder_forward.1} parent=1 // pred_check_branch
      %26 = sbr.rel (0) target = $region5
    $region4: #{insert_decoder_forward.1} parent=1 // pred_region
      %s28 = ssub.s32 128, 128
      %29 = vsyncadd [#allocation3], %s28
      %s31 = sshll.u32 [#allocation2], 4
      %s32 = int_to_ptr.vmem [resolvable:$true] %s31
      %34 = dma.hbm_to_vmem [thread:$0]  %s0, 128, %s32, [#allocation3]
    $region5: #{insert_decoder_forward.1} parent=1 // pred_fallthru
      _
    // Predicated region
    $region6: #{insert_decoder_forward.1} parent=1 // pred_check
      _
    $region7: #{insert_decoder_forward.1} parent=1 // pred_check_branch
      %36 = sbr.rel (0) target = $region9
    $region8: #{insert_decoder_forward.1} parent=1 // pred_region
      _
    $region9: #{insert_decoder_forward.1} parent=1 // pred_fallthru
      _
    // Predicated region
    $region10: #{insert_decoder_forward.1} parent=1 // pred_check
      _
    $region11: #{insert_decoder_forward.1} parent=1 // pred_check_branch
      %38 = sbr.rel (0) target = $region13
    $region12: #{insert_decoder_forward.1} parent=1 // pred_region
      _
    $region13: #{insert_decoder_forward.1} parent=1 // pred_fallthru
      _
    // Predicated region
    $region14: #{insert_decoder_forward.1} parent=1 // pred_check
      _
    $region15: #{insert_decoder_forward.1} parent=1 // pred_check_branch
      %40 = sbr.rel (0) target = $region17
    $region16: #{insert_decoder_forward.1} parent=1 // pred_region
      _
    $region17: #{insert_decoder_forward.1} parent=1 // pred_fallthru
      _
    // Predicated region
    $region18: #{insert_decoder_forward.1} parent=1 // pred_check
      _
    $region19: #{insert_decoder_forward.1} parent=1 // pred_check_branch
      %42 = sbr.rel (0) target = $region21
    $region20: #{insert_decoder_forward.1} parent=1 // pred_region
      _
    $region21: #{insert_decoder_forward.1} parent=1 // pred_fallthru
      _
    // Predicated region
    $region22: #{insert_decoder_forward.1} parent=1 // pred_check
      _
    $region23: #{insert_decoder_forward.1} parent=1 // pred_check_branch
      %44 = sbr.rel (0) target = $region25
    $region24: #{insert_decoder_forward.1} parent=1 // pred_region
      _
    $region25: #{insert_decoder_forward.1} parent=1 // pred_fallthru
      _
    // Predicated region
    $region26: #{insert_decoder_forward.1} parent=1 // pred_check
      _
    $region27: #{insert_decoder_forward.1} parent=1 // pred_check_branch
      %46 = sbr.rel (0) target = $region29
    $region28: #{insert_decoder_forward.1} parent=1 // pred_region
      %s48 = ssub.s32 16, 16
      %49 = vsyncadd [#allocation6], %s48
      %s51 = sshll.u32 [#allocation5], 4
      %s52 = int_to_ptr.vmem [resolvable:$true] %s51
      %54 = dma.hbm_to_vmem [thread:$0]  %s6, 16, %s52, [#allocation6]
    $region29: #{insert_decoder_forward.1} parent=1 // pred_fallthru
      _
    // Predicated region
    $region30: #{insert_decoder_forward.1} parent=1 // pred_check
      _
    $region31: #{insert_decoder_forward.1} parent=1 // pred_check_branch
      %56 = sbr.rel (0) target = $region33
    $region32: #{insert_decoder_forward.1} parent=1 // pred_region
      %s58 = ssub.s32 16, 16
      %59 = vsyncadd [#allocation6], %s58
      %s61 = sshll.u32 [#allocation7], 4
      %s62 = int_to_ptr.vmem [resolvable:$true] %s61
      %64 = dma.hbm_to_vmem [thread:$0]  %s7, 16, %s62, [#allocation6]
    $region33: #{insert_decoder_forward.1} parent=1 // pred_fallthru
      _
    // Predicated region
    $region34: #{insert_decoder_forward.1} parent=1 // pred_check
      _
    $region35: #{insert_decoder_forward.1} parent=1 // pred_check_branch
      %66 = sbr.rel (0) target = $region37
    $region36: #{insert_decoder_forward.1} parent=1 // pred_region
      _
    $region37: #{insert_decoder_forward.1} parent=1 // pred_fallthru
      _
    // Predicated region
    $region38: #{insert_decoder_forward.1} parent=1 // pred_check
      _
    $region39: #{insert_decoder_forward.1} parent=1 // pred_check_branch
      %68 = sbr.rel (0) target = $region41
    $region40: #{insert_decoder_forward.1} parent=1 // pred_region
      _
    $region41: #{insert_decoder_forward.1} parent=1 // pred_fallthru
      _
    // Predicated region
    $region42: #{insert_decoder_forward.1} parent=1 // pred_check
      _
    $region43: #{insert_decoder_forward.1} parent=1 // pred_check_branch
      %70 = sbr.rel (0) target = $region45
    $region44: #{insert_decoder_forward.1} parent=1 // pred_region
      _
    $region45: #{insert_decoder_forward.1} parent=1 // pred_fallthru
      _
    // Predicated region
    $region46: #{insert_decoder_forward.1} parent=1 // pred_check
      _
    $region47: #{insert_decoder_forward.1} parent=1 // pred_check_branch
      %72 = sbr.rel (0) target = $region49
    $region48: #{insert_decoder_forward.1} parent=1 // pred_region
      _
    $region49: #{insert_decoder_forward.1} parent=1 // pred_fallthru
      _
    // Predicated region
    $region50: #{insert_decoder_forward.1} parent=1 // pred_check
      _
    $region51: #{insert_decoder_forward.1} parent=1 // pred_check_branch
      %74 = sbr.rel (0) target = $region53
    $region52: #{insert_decoder_forward.1} parent=1 // pred_region
      _
    $region53: #{insert_decoder_forward.1} parent=1 // pred_fallthru
      _
    // Predicated region
    $region54: #{insert_decoder_forward.1} parent=1 // pred_check
      _
    $region55: #{insert_decoder_forward.1} parent=1 // pred_check_branch
      %76 = sbr.rel (0) target = $region57
    $region56: #{insert_decoder_forward.1} parent=1 // pred_region
      _
    $region57: #{insert_decoder_forward.1} parent=1 // pred_fallthru
      _
    // Predicated region
    $region58: #{insert_decoder_forward.1} parent=1 // pred_check
      _
    $region59: #{insert_decoder_forward.1} parent=1 // pred_check_branch
      %78 = sbr.rel (0) target = $region61
    $region60: #{insert_decoder_forward.1} parent=1 // pred_region
      _
    $region61: #{insert_decoder_forward.1} parent=1 // pred_fallthru
      _
    // Predicated region
    $region62: #{insert_decoder_forward.1} parent=1 // pred_check
      _
    $region63: #{insert_decoder_forward.1} parent=1 // pred_check_branch
      %80 = sbr.rel (0) target = $region65
    $region64: #{insert_decoder_forward.1} parent=1 // pred_region
      %81 = dma.done [#allocation3], 128
    $region65: #{insert_decoder_forward.1} parent=1 // pred_fallthru
      _
    // Predicated region
    $region66: #{insert_decoder_forward.1} parent=1 // pred_check
      _
    $region67: #{insert_decoder_forward.1} parent=1 // pred_check_branch
      %83 = sbr.rel (0) target = $region69
    $region68: #{insert_decoder_forward.1} parent=1 // pred_region
      %84 = dma.done [#allocation6], 16
    $region69: #{insert_decoder_forward.1} parent=1 // pred_fallthru
      _
    // Predicated region
    $region70: #{insert_decoder_forward.1} parent=1 // pred_check
      _
    $region71: #{insert_decoder_forward.1} parent=1 // pred_check_branch
      %86 = sbr.rel (0) target = $region73
    $region72: #{insert_decoder_forward.1} parent=1 // pred_region
      %87 = dma.done [#allocation6], 16
    $region73: #{insert_decoder_forward.1} parent=1 // pred_fallthru
      _
    %v88 = vld [vmem:[#allocation2] sm:$0xff]
    %v89 = vld [vmem:[%s1] sm:$0xff]
    %v90 = vld [vmem:[%s1 + $0x8] sm:$0xff]
    %v91 = vld [vmem:[%s1 + $0x10] sm:$0xff]
    %v92 = vld [vmem:[%s1 + $0x18] sm:$0xff]
    %v93 = vld [vmem:[%s1 + $0x20] sm:$0xff]
    %v94 = vld [vmem:[%s1 + $0x28] sm:$0xff]
    %v95 = vld [vmem:[%s1 + $0x30] sm:$0xff]
    %v96 = vld [vmem:[%s1 + $0x38] sm:$0xff]
    %v97 = vld [vmem:[%s1 + $0x40] sm:$0xff]
    %v98 = vld [vmem:[%s1 + $0x48] sm:$0xff]
    %v99 = vld [vmem:[%s1 + $0x50] sm:$0xff]
    %v100 = vld [vmem:[%s1 + $0x58] sm:$0xff]
    %v101 = vld [vmem:[%s1 + $0x60] sm:$0xff]
    %v102 = vld [vmem:[%s1 + $0x68] sm:$0xff]
    %v103 = vld [vmem:[%s1 + $0x70] sm:$0xff]
    %v104 = vld [vmem:[%s1 + $0x78] sm:$0xff]
    %v105 = vld [vmem:[%s2] sm:$0x1]
    %v106 = vld [vmem:[%s3] sm:$0xff]
    %v107 = vld [vmem:[%s3 + $0x8] sm:$0xff]
    %v108 = vld [vmem:[%s3 + $0x10] sm:$0xff]
    %v109 = vld [vmem:[%s3 + $0x18] sm:$0xff]
    %v110 = vld [vmem:[%s3 + $0x20] sm:$0xff]
    %v111 = vld [vmem:[%s3 + $0x28] sm:$0xff]
    %v112 = vld [vmem:[%s3 + $0x30] sm:$0xff]
    %v113 = vld [vmem:[%s3 + $0x38] sm:$0xff]
    %v114 = vld [vmem:[%s3 + $0x40] sm:$0xff]
    %v115 = vld [vmem:[%s3 + $0x48] sm:$0xff]
    %v116 = vld [vmem:[%s3 + $0x50] sm:$0xff]
    %v117 = vld [vmem:[%s3 + $0x58] sm:$0xff]
    %v118 = vld [vmem:[%s3 + $0x60] sm:$0xff]
    %v119 = vld [vmem:[%s3 + $0x68] sm:$0xff]
    %v120 = vld [vmem:[%s3 + $0x70] sm:$0xff]
    %v121 = vld [vmem:[%s3 + $0x78] sm:$0xff]
    %v122 = vld [vmem:[%s4] sm:$0x1]
    %v123 = vld [vmem:[%s5] sm:$0xff]
    %v124 = vld [vmem:[%s5 + $0x8] sm:$0xff]
    %v125 = vld [vmem:[#allocation5] sm:$0x1]
    %v126 = vld [vmem:[#allocation7] sm:$0x1]
    %v128 = vlaneseq
    %v129 = vshrl.u32 %v128, 7
    %v130 = vsub.s32 0, %v129
    %v131 = vrot.slane %v105, %v130
    %133 = vmatprep.subr.mxu0 0.0
    %134 = vmatpush1.msra.mxu0 %v104
    %135 = vmatprep.subr.mxu0 0.0
    %136 = vmatpush1.msra.mxu0 %v103
    %137 = vmatprep.subr.mxu0 0.0
    %138 = vmatpush1.msra.mxu0 %v102
    %139 = vmatprep.subr.mxu0 0.0
    %140 = vmatpush1.msra.mxu0 %v101
    %141 = vmatprep.subr.mxu0 0.0
    %142 = vmatpush1.msra.mxu0 %v100
    %143 = vmatprep.subr.mxu0 0.0
    %144 = vmatpush1.msra.mxu0 %v99
    %145 = vmatprep.subr.mxu0 0.0
    %146 = vmatpush1.msra.mxu0 %v98
    %147 = vmatprep.subr.mxu0 0.0
    %148 = vmatpush1.msra.mxu0 %v97
    %149 = vmatprep.subr.mxu0 0.0
    %150 = vmatpush1.msra.mxu0 %v96
    %151 = vmatprep.subr.mxu0 0.0
    %152 = vmatpush1.msra.mxu0 %v95
    %153 = vmatprep.subr.mxu0 0.0
    %154 = vmatpush1.msra.mxu0 %v94
    %155 = vmatprep.subr.mxu0 0.0
    %156 = vmatpush1.msra.mxu0 %v93
    %157 = vmatprep.subr.mxu0 0.0
    %158 = vmatpush1.msra.mxu0 %v92
    %159 = vmatprep.subr.mxu0 0.0
    %160 = vmatpush1.msra.mxu0 %v91
    %161 = vmatprep.subr.mxu0 0.0
    %162 = vmatpush1.msra.mxu0 %v90
    %163 = vmatprep.subr.mxu0 0.0
    %164 = vmatpush1.msra.mxu0 %v89
    %165 = vmatprep.subr.mxu0 0.0
    %166 = vmatpush2.msra.mxu0 0.0
    %167 = vmatprep.subr.mxu0 0.0
    %168 = vmatpush2.msra.mxu0 0.0
    %169 = vmatprep.subr.mxu0 0.0
    %170 = vmatpush2.msra.mxu0 0.0
    %171 = vmatprep.subr.mxu0 0.0
    %172 = vmatpush2.msra.mxu0 0.0
    %173 = vmatprep.subr.mxu0 0.0
    %174 = vmatpush2.msra.mxu0 0.0
    %175 = vmatprep.subr.mxu0 0.0
    %176 = vmatpush2.msra.mxu0 0.0
    %177 = vmatprep.subr.mxu0 0.0
    %178 = vmatpush2.msra.mxu0 0.0
    %179 = vmatprep.subr.mxu0 0.0
    %180 = vmatpush2.msra.mxu0 0.0
    %181 = vmatprep.subr.mxu0 0.0
    %182 = vmatpush2.msra.mxu0 0.0
    %183 = vmatprep.subr.mxu0 0.0
    %184 = vmatpush2.msra.mxu0 0.0
    %185 = vmatprep.subr.mxu0 0.0
    %186 = vmatpush2.msra.mxu0 0.0
    %187 = vmatprep.subr.mxu0 0.0
    %188 = vmatpush2.msra.mxu0 0.0
    %189 = vmatprep.subr.mxu0 0.0
    %190 = vmatpush2.msra.mxu0 0.0
    %191 = vmatprep.subr.mxu0 0.0
    %192 = vmatpush2.msra.mxu0 0.0
    %193 = vmatprep.subr.mxu0 0.0
    %194 = vmatpush2.msra.mxu0 0.0
    %195 = vmatprep.subr.mxu0 0.0
    %196 = vmatpush2.msra.mxu0 0.0
    %197 = vmatprep.mubr.f32.mxu0 0.0
    %198 = vmatmul.mubr.f32.gmra.mxu0 %v88
    %v199 = vpop.f32.mrf.mxu0
    %v200 = vadd.f32 %v131, %v199
    %v201 = vpop.f32.mrf.mxu0
    %202 = vdwg.mxu0
    %v203 = vmax.f32 %v200, 0.0
    %v205 = vlaneseq
    %v206 = vshrl.u32 %v205, 7
    %v207 = vsub.s32 0, %v206
    %v208 = vrot.slane %v122, %v207
    %210 = vmatprep.subr.mxu0 0.0
    %211 = vmatpush1.msra.mxu0 %v121
    %212 = vmatprep.subr.mxu0 0.0
    %213 = vmatpush1.msra.mxu0 %v120
    %214 = vmatprep.subr.mxu0 0.0
    %215 = vmatpush1.msra.mxu0 %v119
    %216 = vmatprep.subr.mxu0 0.0
    %217 = vmatpush1.msra.mxu0 %v118
    %218 = vmatprep.subr.mxu0 0.0
    %219 = vmatpush1.msra.mxu0 %v117
    %220 = vmatprep.subr.mxu0 0.0
    %221 = vmatpush1.msra.mxu0 %v116
    %222 = vmatprep.subr.mxu0 0.0
    %223 = vmatpush1.msra.mxu0 %v115
    %224 = vmatprep.subr.mxu0 0.0
    %225 = vmatpush1.msra.mxu0 %v114
    %226 = vmatprep.subr.mxu0 0.0
    %227 = vmatpush1.msra.mxu0 %v113
    %228 = vmatprep.subr.mxu0 0.0
    %229 = vmatpush1.msra.mxu0 %v112
    %230 = vmatprep.subr.mxu0 0.0
    %231 = vmatpush1.msra.mxu0 %v111
    %232 = vmatprep.subr.mxu0 0.0
    %233 = vmatpush1.msra.mxu0 %v110
    %234 = vmatprep.subr.mxu0 0.0
    %235 = vmatpush1.msra.mxu0 %v109
    %236 = vmatprep.subr.mxu0 0.0
    %237 = vmatpush1.msra.mxu0 %v108
    %238 = vmatprep.subr.mxu0 0.0
    %239 = vmatpush1.msra.mxu0 %v107
    %240 = vmatprep.subr.mxu0 0.0
    %241 = vmatpush1.msra.mxu0 %v106
    %242 = vmatprep.subr.mxu0 0.0
    %243 = vmatpush2.msra.mxu0 0.0
    %244 = vmatprep.subr.mxu0 0.0
    %245 = vmatpush2.msra.mxu0 0.0
    %246 = vmatprep.subr.mxu0 0.0
    %247 = vmatpush2.msra.mxu0 0.0
    %248 = vmatprep.subr.mxu0 0.0
    %249 = vmatpush2.msra.mxu0 0.0
    %250 = vmatprep.subr.mxu0 0.0
    %251 = vmatpush2.msra.mxu0 0.0
    %252 = vmatprep.subr.mxu0 0.0
    %253 = vmatpush2.msra.mxu0 0.0
    %254 = vmatprep.subr.mxu0 0.0
    %255 = vmatpush2.msra.mxu0 0.0
    %256 = vmatprep.subr.mxu0 0.0
    %257 = vmatpush2.msra.mxu0 0.0
    %258 = vmatprep.subr.mxu0 0.0
    %259 = vmatpush2.msra.mxu0 0.0
    %260 = vmatprep.subr.mxu0 0.0
    %261 = vmatpush2.msra.mxu0 0.0
    %262 = vmatprep.subr.mxu0 0.0
    %263 = vmatpush2.msra.mxu0 0.0
    %264 = vmatprep.subr.mxu0 0.0
    %265 = vmatpush2.msra.mxu0 0.0
    %266 = vmatprep.subr.mxu0 0.0
    %267 = vmatpush2.msra.mxu0 0.0
    %268 = vmatprep.subr.mxu0 0.0
    %269 = vmatpush2.msra.mxu0 0.0
    %270 = vmatprep.subr.mxu0 0.0
    %271 = vmatpush2.msra.mxu0 0.0
    %272 = vmatprep.subr.mxu0 0.0
    %273 = vmatpush2.msra.mxu0 0.0
    %274 = vmatprep.mubr.f32.mxu0 0.0
    %275 = vmatmul.mubr.f32.gmra.mxu0 %v203
    %v276 = vpop.f32.mrf.mxu0
    %v277 = vadd.f32 %v208, %v276
    %v278 = vpop.f32.mrf.mxu0
    %279 = vdwg.mxu0
    %vm280 = vcmask 130048
    %v281 = vsel %vm280, %v277, -inf
    %282 = vmax.xlane.f32.xlu0 %v281
    %v283 = vpop.xlane.xlu0 %282
    %v284 = vsub.f32 %v277, %v283
    %v285 = vmul.f32 %v284, 1.442695
    %v286 = vpow.pop %v285
    %v287 = vsel %vm280, %v286, 0.0
    %288 = vadd.xlane.f32.xlu0 %v287
    %v289 = vpop.xlane.xlu0 %288
    %v290 = vrcp.pop %v289
    %v291 = vlog2.pop %v289
    %v292 = vmul.f32 %v291, 0.6931472
    %v293 = vsub.f32 %v284, %v292
    %v294 = vmul.f32 %v286, %v290
    %v295 = vlaneseq
    %v296 = vand.u32 %v295, 127
    %vm297 = vcmp.ge.f32.partialorder %v277, %v283
    %v298 = vsel %vm297, %v296, 16
    %v299 = vsel %vm280, %v298, 2147483647
    %v300 = vand.u32 %v299, 65535
    %v301 = vshra.s32 %v299, 16
    %v302 = vcvt.s32.f32 %v300
    %v303 = vcvt.s32.f32 %v301
    %304 = vmin.xlane.f32.xlu0 %v303
    %v305 = vpop.xlane.xlu0 %304
    %vm306 = vcmp.eq.f32.partialorder %v303, %v305
    %v307 = vsel %vm306, %v302, inf
    %308 = vmin.xlane.f32.xlu0 %v307
    %v309 = vpop.xlane.xlu0 %308
    %v310 = vcvt.f32.s32 %v309
    %v311 = vcvt.f32.s32 %v305
    %v312 = vshll.u32 %v311, 16
    %v313 = vadd.s32 %v312, %v310
    %vm314 = vcmp.eq.s32.totalorder %v296, %v313
    %v315 = vsel %vm314, 1, 0
    %v316 = vcvt.s32.f32 %v315
    %v317 = vmul.f32 %v316, %v293
    %v318 = vsel %vm280, %v317, 0.0
    %319 = vadd.xlane.f32.xlu0 %v318
    %v320 = vpop.xlane.xlu0 %319
    %v321 = vmul.f32 %v294, %v293
    %v322 = vsel %vm280, %v321, 0.0
    %323 = vadd.xlane.f32.xlu0 %v322
    %v324 = vpop.xlane.xlu0 %323
    %v325 = vsub.f32 0.0, %v324
    %v327 = vsel %vm280, %v316, 0
    %329 = vmatprep.subr.mxu0 0.0
    %330 = vmatpush1.msra.mxu0 0.0
    %331 = vmatprep.subr.mxu0 0.0
    %332 = vmatpush1.msra.mxu0 0.0
    %333 = vmatprep.subr.mxu0 0.0
    %334 = vmatpush1.msra.mxu0 0.0
    %335 = vmatprep.subr.mxu0 0.0
    %336 = vmatpush1.msra.mxu0 0.0
    %337 = vmatprep.subr.mxu0 0.0
    %338 = vmatpush1.msra.mxu0 0.0
    %339 = vmatprep.subr.mxu0 0.0
    %340 = vmatpush1.msra.mxu0 0.0
    %341 = vmatprep.subr.mxu0 0.0
    %342 = vmatpush1.msra.mxu0 0.0
    %343 = vmatprep.subr.mxu0 0.0
    %344 = vmatpush1.msra.mxu0 0.0
    %345 = vmatprep.subr.mxu0 0.0
    %346 = vmatpush1.msra.mxu0 0.0
    %347 = vmatprep.subr.mxu0 0.0
    %348 = vmatpush1.msra.mxu0 0.0
    %349 = vmatprep.subr.mxu0 0.0
    %350 = vmatpush1.msra.mxu0 0.0
    %351 = vmatprep.subr.mxu0 0.0
    %352 = vmatpush1.msra.mxu0 0.0
    %353 = vmatprep.subr.mxu0 0.0
    %354 = vmatpush1.msra.mxu0 0.0
    %355 = vmatprep.subr.mxu0 0.0
    %356 = vmatpush1.msra.mxu0 0.0
    %357 = vmatprep.subr.mxu0 0.0
    %358 = vmatpush1.msra.mxu0 %v124
    %359 = vmatprep.subr.mxu0 0.0
    %360 = vmatpush1.msra.mxu0 %v123
    %361 = vmatprep.subr.mxu0 0.0
    %362 = vmatpush2.msra.mxu0 0.0
    %363 = vmatprep.subr.mxu0 0.0
    %364 = vmatpush2.msra.mxu0 0.0
    %365 = vmatprep.subr.mxu0 0.0
    %366 = vmatpush2.msra.mxu0 0.0
    %367 = vmatprep.subr.mxu0 0.0
    %368 = vmatpush2.msra.mxu0 0.0
    %369 = vmatprep.subr.mxu0 0.0
    %370 = vmatpush2.msra.mxu0 0.0
    %371 = vmatprep.subr.mxu0 0.0
    %372 = vmatpush2.msra.mxu0 0.0
    %373 = vmatprep.subr.mxu0 0.0
    %374 = vmatpush2.msra.mxu0 0.0
    %375 = vmatprep.subr.mxu0 0.0
    %376 = vmatpush2.msra.mxu0 0.0
    %377 = vmatprep.subr.mxu0 0.0
    %378 = vmatpush2.msra.mxu0 0.0
    %379 = vmatprep.subr.mxu0 0.0
    %380 = vmatpush2.msra.mxu0 0.0
    %381 = vmatprep.subr.mxu0 0.0
    %382 = vmatpush2.msra.mxu0 0.0
    %383 = vmatprep.subr.mxu0 0.0
    %384 = vmatpush2.msra.mxu0 0.0
    %385 = vmatprep.subr.mxu0 0.0
    %386 = vmatpush2.msra.mxu0 0.0
    %387 = vmatprep.subr.mxu0 0.0
    %388 = vmatpush2.msra.mxu0 0.0
    %389 = vmatprep.subr.mxu0 0.0
    %390 = vmatpush2.msra.mxu0 0.0
    %391 = vmatprep.subr.mxu0 0.0
    %392 = vmatpush2.msra.mxu0 0.0
    %393 = vmatprep.mubr.f32.mxu0 0.0
    %394 = vmatmul.mubr.f32.gmra.mxu0 %v327
    %v395 = vpop.f32.mrf.mxu0
    %v396 = vadd.f32 0.0, %v395
    %v397 = vpop.f32.mrf.mxu0
    %398 = vdwg.mxu0
    %v399 = vadd.f32 %v88, %v396
    %400 = vadd.xlane.f32.xlu0 %v399
    %v401 = vpop.xlane.xlu0 %400
    %v402 = vrcp.pop 128.0
    %v403 = vmul.f32 %v401, %v402
    %v404 = vmul.f32 %v399, %v399
    %405 = vadd.xlane.f32.xlu0 %v404
    %v406 = vpop.xlane.xlu0 %405
    %v407 = vmul.f32 %v406, %v402
    %v408 = vmul.f32 %v403, %v403
    %v409 = vsub.f32 %v407, %v408
    %v410 = vsub.f32 %v399, %v403
    %v411 = vadd.f32 %v409, 1e-05
    %v412 = vrsqrt.pop %v411
    %v413 = vmul.f32 %v410, %v412
    %v415 = vlaneseq
    %v416 = vshrl.u32 %v415, 7
    %v417 = vsub.s32 0, %v416
    %v418 = vrot.slane %v125, %v417
    %v420 = vmul.f32 %v413, %v418
    %v422 = vlaneseq
    %v423 = vshrl.u32 %v422, 7
    %v424 = vsub.s32 0, %v423
    %v425 = vrot.slane %v126, %v424
    %v427 = vadd.f32 %v420, %v425
    %v428 = vld [vmem:[%s8] sm:$0xff]
    %v429 = vld [vmem:[%s8 + $0x8] sm:$0xff]
    %v430 = vld [vmem:[%s8 + $0x10] sm:$0xff]
    %v431 = vld [vmem:[%s8 + $0x18] sm:$0xff]
    %v432 = vld [vmem:[%s8 + $0x20] sm:$0xff]
    %v433 = vld [vmem:[%s8 + $0x28] sm:$0xff]
    %v434 = vld [vmem:[%s8 + $0x30] sm:$0xff]
    %v435 = vld [vmem:[%s8 + $0x38] sm:$0xff]
    %v436 = vld [vmem:[%s8 + $0x40] sm:$0xff]
    %v437 = vld [vmem:[%s8 + $0x48] sm:$0xff]
    %v438 = vld [vmem:[%s8 + $0x50] sm:$0xff]
    %v439 = vld [vmem:[%s8 + $0x58] sm:$0xff]
    %v440 = vld [vmem:[%s8 + $0x60] sm:$0xff]
    %v441 = vld [vmem:[%s8 + $0x68] sm:$0xff]
    %v442 = vld [vmem:[%s8 + $0x70] sm:$0xff]
    %v443 = vld [vmem:[%s8 + $0x78] sm:$0xff]
    %v444 = vld [vmem:[%s9] sm:$0x1]
    %v445 = vld [vmem:[%s10] sm:$0xff]
    %v446 = vld [vmem:[%s10 + $0x8] sm:$0xff]
    %v447 = vld [vmem:[%s10 + $0x10] sm:$0xff]
    %v448 = vld [vmem:[%s10 + $0x18] sm:$0xff]
    %v449 = vld [vmem:[%s10 + $0x20] sm:$0xff]
    %v450 = vld [vmem:[%s10 + $0x28] sm:$0xff]
    %v451 = vld [vmem:[%s10 + $0x30] sm:$0xff]
    %v452 = vld [vmem:[%s10 + $0x38] sm:$0xff]
    %v453 = vld [vmem:[%s10 + $0x40] sm:$0xff]
    %v454 = vld [vmem:[%s10 + $0x48] sm:$0xff]
    %v455 = vld [vmem:[%s10 + $0x50] sm:$0xff]
    %v456 = vld [vmem:[%s10 + $0x58] sm:$0xff]
    %v457 = vld [vmem:[%s10 + $0x60] sm:$0xff]
    %v458 = vld [vmem:[%s10 + $0x68] sm:$0xff]
    %v459 = vld [vmem:[%s10 + $0x70] sm:$0xff]
    %v460 = vld [vmem:[%s10 + $0x78] sm:$0xff]
    %v461 = vld [vmem:[%s11] sm:$0x1]
    %v462 = vld [vmem:[%s12] sm:$0xff]
    %v463 = vld [vmem:[%s13] sm:$0x1]
    %v464 = vld [vmem:[%s14] sm:$0x1]
    %v466 = vlaneseq
    %v467 = vshrl.u32 %v466, 7
    %v468 = vsub.s32 0, %v467
    %v469 = vrot.slane %v444, %v468
    %471 = vmatprep.subr.mxu0 0.0
    %472 = vmatpush1.msra.mxu0 %v443
    %473 = vmatprep.subr.mxu0 0.0
    %474 = vmatpush1.msra.mxu0 %v442
    %475 = vmatprep.subr.mxu0 0.0
    %476 = vmatpush1.msra.mxu0 %v441
    %477 = vmatprep.subr.mxu0 0.0
    %478 = vmatpush1.msra.mxu0 %v440
    %479 = vmatprep.subr.mxu0 0.0
    %480 = vmatpush1.msra.mxu0 %v439
    %481 = vmatprep.subr.mxu0 0.0
    %482 = vmatpush1.msra.mxu0 %v438
    %483 = vmatprep.subr.mxu0 0.0
    %484 = vmatpush1.msra.mxu0 %v437
    %485 = vmatprep.subr.mxu0 0.0
    %486 = vmatpush1.msra.mxu0 %v436
    %487 = vmatprep.subr.mxu0 0.0
    %488 = vmatpush1.msra.mxu0 %v435
    %489 = vmatprep.subr.mxu0 0.0
    %490 = vmatpush1.msra.mxu0 %v434
    %491 = vmatprep.subr.mxu0 0.0
    %492 = vmatpush1.msra.mxu0 %v433
    %493 = vmatprep.subr.mxu0 0.0
    %494 = vmatpush1.msra.mxu0 %v432
    %495 = vmatprep.subr.mxu0 0.0
    %496 = vmatpush1.msra.mxu0 %v431
    %497 = vmatprep.subr.mxu0 0.0
    %498 = vmatpush1.msra.mxu0 %v430
    %499 = vmatprep.subr.mxu0 0.0
    %500 = vmatpush1.msra.mxu0 %v429
    %501 = vmatprep.subr.mxu0 0.0
    %502 = vmatpush1.msra.mxu0 %v428
    %503 = vmatprep.subr.mxu0 0.0
    %504 = vmatpush2.msra.mxu0 0.0
    %505 = vmatprep.subr.mxu0 0.0
    %506 = vmatpush2.msra.mxu0 0.0
    %507 = vmatprep.subr.mxu0 0.0
    %508 = vmatpush2.msra.mxu0 0.0
    %509 = vmatprep.subr.mxu0 0.0
    %510 = vmatpush2.msra.mxu0 0.0
    %511 = vmatprep.subr.mxu0 0.0
    %512 = vmatpush2.msra.mxu0 0.0
    %513 = vmatprep.subr.mxu0 0.0
    %514 = vmatpush2.msra.mxu0 0.0
    %515 = vmatprep.subr.mxu0 0.0
    %516 = vmatpush2.msra.mxu0 0.0
    %517 = vmatprep.subr.mxu0 0.0
    %518 = vmatpush2.msra.mxu0 0.0
    %519 = vmatprep.subr.mxu0 0.0
    %520 = vmatpush2.msra.mxu0 0.0
    %521 = vmatprep.subr.mxu0 0.0
    %522 = vmatpush2.msra.mxu0 0.0
    %523 = vmatprep.subr.mxu0 0.0
    %524 = vmatpush2.msra.mxu0 0.0
    %525 = vmatprep.subr.mxu0 0.0
    %526 = vmatpush2.msra.mxu0 0.0
    %527 = vmatprep.subr.mxu0 0.0
    %528 = vmatpush2.msra.mxu0 0.0
    %529 = vmatprep.subr.mxu0 0.0
    %530 = vmatpush2.msra.mxu0 0.0
    %531 = vmatprep.subr.mxu0 0.0
    %532 = vmatpush2.msra.mxu0 0.0
    %533 = vmatprep.subr.mxu0 0.0
    %534 = vmatpush2.msra.mxu0 0.0
    %535 = vmatprep.mubr.f32.mxu0 0.0
    %536 = vmatmul.mubr.f32.gmra.mxu0 %v427
    %v537 = vpop.f32.mrf.mxu0
    %v538 = vadd.f32 %v469, %v537
    %v539 = vpop.f32.mrf.mxu0
    %540 = vdwg.mxu0
    %v541 = vmax.f32 %v538, 0.0
    %v543 = vlaneseq
    %v544 = vshrl.u32 %v543, 7
    %v545 = vsub.s32 0, %v544
    %v546 = vrot.slane %v461, %v545
    %548 = vmatprep.subr.mxu0 0.0
    %549 = vmatpush1.msra.mxu0 %v460
    %550 = vmatprep.subr.mxu0 0.0
    %551 = vmatpush1.msra.mxu0 %v459
    %552 = vmatprep.subr.mxu0 0.0
    %553 = vmatpush1.msra.mxu0 %v458
    %554 = vmatprep.subr.mxu0 0.0
    %555 = vmatpush1.msra.mxu0 %v457
    %556 = vmatprep.subr.mxu0 0.0
    %557 = vmatpush1.msra.mxu0 %v456
    %558 = vmatprep.subr.mxu0 0.0
    %559 = vmatpush1.msra.mxu0 %v455
    %560 = vmatprep.subr.mxu0 0.0
    %561 = vmatpush1.msra.mxu0 %v454
    %562 = vmatprep.subr.mxu0 0.0
    %563 = vmatpush1.msra.mxu0 %v453
    %564 = vmatprep.subr.mxu0 0.0
    %565 = vmatpush1.msra.mxu0 %v452
    %566 = vmatprep.subr.mxu0 0.0
    %567 = vmatpush1.msra.mxu0 %v451
    %568 = vmatprep.subr.mxu0 0.0
    %569 = vmatpush1.msra.mxu0 %v450
    %570 = vmatprep.subr.mxu0 0.0
    %571 = vmatpush1.msra.mxu0 %v449
    %572 = vmatprep.subr.mxu0 0.0
    %573 = vmatpush1.msra.mxu0 %v448
    %574 = vmatprep.subr.mxu0 0.0
    %575 = vmatpush1.msra.mxu0 %v447
    %576 = vmatprep.subr.mxu0 0.0
    %577 = vmatpush1.msra.mxu0 %v446
    %578 = vmatprep.subr.mxu0 0.0
    %579 = vmatpush1.msra.mxu0 %v445
    %580 = vmatprep.subr.mxu0 0.0
    %581 = vmatpush2.msra.mxu0 0.0
    %582 = vmatprep.subr.mxu0 0.0
    %583 = vmatpush2.msra.mxu0 0.0
    %584 = vmatprep.subr.mxu0 0.0
    %585 = vmatpush2.msra.mxu0 0.0
    %586 = vmatprep.subr.mxu0 0.0
    %587 = vmatpush2.msra.mxu0 0.0
    %588 = vmatprep.subr.mxu0 0.0
    %589 = vmatpush2.msra.mxu0 0.0
    %590 = vmatprep.subr.mxu0 0.0
    %591 = vmatpush2.msra.mxu0 0.0
    %592 = vmatprep.subr.mxu0 0.0
    %593 = vmatpush2.msra.mxu0 0.0
    %594 = vmatprep.subr.mxu0 0.0
    %595 = vmatpush2.msra.mxu0 0.0
    %596 = vmatprep.subr.mxu0 0.0
    %597 = vmatpush2.msra.mxu0 0.0
    %598 = vmatprep.subr.mxu0 0.0
    %599 = vmatpush2.msra.mxu0 0.0
    %600 = vmatprep.subr.mxu0 0.0
    %601 = vmatpush2.msra.mxu0 0.0
    %602 = vmatprep.subr.mxu0 0.0
    %603 = vmatpush2.msra.mxu0 0.0
    %604 = vmatprep.subr.mxu0 0.0
    %605 = vmatpush2.msra.mxu0 0.0
    %606 = vmatprep.subr.mxu0 0.0
    %607 = vmatpush2.msra.mxu0 0.0
    %608 = vmatprep.subr.mxu0 0.0
    %609 = vmatpush2.msra.mxu0 0.0
    %610 = vmatprep.subr.mxu0 0.0
    %611 = vmatpush2.msra.mxu0 0.0
    %612 = vmatprep.mubr.f32.mxu0 0.0
    %613 = vmatmul.mubr.f32.gmra.mxu0 %v541
    %v614 = vpop.f32.mrf.mxu0
    %v615 = vadd.f32 %v546, %v614
    %v616 = vpop.f32.mrf.mxu0
    %617 = vdwg.mxu0
    %vm618 = vcmask 64512
    %v619 = vsel %vm618, %v615, -inf
    %620 = vmax.xlane.f32.xlu0 %v619
    %v621 = vpop.xlane.xlu0 %620
    %v622 = vsub.f32 %v615, %v621
    %v623 = vmul.f32 %v622, 1.442695
    %v624 = vpow.pop %v623
    %v625 = vsel %vm618, %v624, 0.0
    %626 = vadd.xlane.f32.xlu0 %v625
    %v627 = vpop.xlane.xlu0 %626
    %v628 = vrcp.pop %v627
    %v629 = vlog2.pop %v627
    %v630 = vmul.f32 %v629, 0.6931472
    %v631 = vsub.f32 %v622, %v630
    %v632 = vmul.f32 %v624, %v628
    %vm633 = vcmp.ge.f32.partialorder %v615, %v621
    %v634 = vsel %vm633, %v296, 8
    %v635 = vsel %vm618, %v634, 2147483647
    %v636 = vand.u32 %v635, 65535
    %v637 = vshra.s32 %v635, 16
    %v638 = vcvt.s32.f32 %v636
    %v639 = vcvt.s32.f32 %v637
    %640 = vmin.xlane.f32.xlu0 %v639
    %v641 = vpop.xlane.xlu0 %640
    %vm642 = vcmp.eq.f32.partialorder %v639, %v641
    %v643 = vsel %vm642, %v638, inf
    %644 = vmin.xlane.f32.xlu0 %v643
    %v645 = vpop.xlane.xlu0 %644
    %v646 = vcvt.f32.s32 %v645
    %v647 = vcvt.f32.s32 %v641
    %v648 = vshll.u32 %v647, 16
    %v649 = vadd.s32 %v648, %v646
    %vm650 = vcmp.eq.s32.totalorder %v296, %v649
    %v651 = vsel %vm650, 1, 0
    %v652 = vcvt.s32.f32 %v651
    %v653 = vmul.f32 %v652, %v631
    %v654 = vsel %vm618, %v653, 0.0
    %655 = vadd.xlane.f32.xlu0 %v654
    %v656 = vpop.xlane.xlu0 %655
    %v657 = vmul.f32 %v632, %v631
    %v658 = vsel %vm618, %v657, 0.0
    %659 = vadd.xlane.f32.xlu0 %v658
    %v660 = vpop.xlane.xlu0 %659
    %v661 = vsub.f32 0.0, %v660
    %v663 = vsel %vm618, %v652, 0
    %665 = vmatprep.subr.mxu0 0.0
    %666 = vmatpush1.msra.mxu0 0.0
    %667 = vmatprep.subr.mxu0 0.0
    %668 = vmatpush1.msra.mxu0 0.0
    %669 = vmatprep.subr.mxu0 0.0
    %670 = vmatpush1.msra.mxu0 0.0
    %671 = vmatprep.subr.mxu0 0.0
    %672 = vmatpush1.msra.mxu0 0.0
    %673 = vmatprep.subr.mxu0 0.0
    %674 = vmatpush1.msra.mxu0 0.0
    %675 = vmatprep.subr.mxu0 0.0
    %676 = vmatpush1.msra.mxu0 0.0
    %677 = vmatprep.subr.mxu0 0.0
    %678 = vmatpush1.msra.mxu0 0.0
    %679 = vmatprep.subr.mxu0 0.0
    %680 = vmatpush1.msra.mxu0 0.0
    %681 = vmatprep.subr.mxu0 0.0
    %682 = vmatpush1.msra.mxu0 0.0
    %683 = vmatprep.subr.mxu0 0.0
    %684 = vmatpush1.msra.mxu0 0.0
    %685 = vmatprep.subr.mxu0 0.0
    %686 = vmatpush1.msra.mxu0 0.0
    %687 = vmatprep.subr.mxu0 0.0
    %688 = vmatpush1.msra.mxu0 0.0
    %689 = vmatprep.subr.mxu0 0.0
    %690 = vmatpush1.msra.mxu0 0.0
    %691 = vmatprep.subr.mxu0 0.0
    %692 = vmatpush1.msra.mxu0 0.0
    %693 = vmatprep.subr.mxu0 0.0
    %694 = vmatpush1.msra.mxu0 0.0
    %695 = vmatprep.subr.mxu0 0.0
    %696 = vmatpush1.msra.mxu0 %v462
    %697 = vmatprep.subr.mxu0 0.0
    %698 = vmatpush2.msra.mxu0 0.0
    %699 = vmatprep.subr.mxu0 0.0
    %700 = vmatpush2.msra.mxu0 0.0
    %701 = vmatprep.subr.mxu0 0.0
    %702 = vmatpush2.msra.mxu0 0.0
    %703 = vmatprep.subr.mxu0 0.0
    %704 = vmatpush2.msra.mxu0 0.0
    %705 = vmatprep.subr.mxu0 0.0
    %706 = vmatpush2.msra.mxu0 0.0
    %707 = vmatprep.subr.mxu0 0.0
    %708 = vmatpush2.msra.mxu0 0.0
    %709 = vmatprep.subr.mxu0 0.0
    %710 = vmatpush2.msra.mxu0 0.0
    %711 = vmatprep.subr.mxu0 0.0
    %712 = vmatpush2.msra.mxu0 0.0
    %713 = vmatprep.subr.mxu0 0.0
    %714 = vmatpush2.msra.mxu0 0.0
    %715 = vmatprep.subr.mxu0 0.0
    %716 = vmatpush2.msra.mxu0 0.0
    %717 = vmatprep.subr.mxu0 0.0
    %718 = vmatpush2.msra.mxu0 0.0
    %719 = vmatprep.subr.mxu0 0.0
    %720 = vmatpush2.msra.mxu0 0.0
    %721 = vmatprep.subr.mxu0 0.0
    %722 = vmatpush2.msra.mxu0 0.0
    %723 = vmatprep.subr.mxu0 0.0
    %724 = vmatpush2.msra.mxu0 0.0
    %725 = vmatprep.subr.mxu0 0.0
    %726 = vmatpush2.msra.mxu0 0.0
    %727 = vmatprep.subr.mxu0 0.0
    %728 = vmatpush2.msra.mxu0 0.0
    %729 = vmatprep.mubr.f32.mxu0 0.0
    %730 = vmatmul.mubr.f32.gmra.mxu0 %v663
    %v731 = vpop.f32.mrf.mxu0
    %v732 = vadd.f32 0.0, %v731
    %v733 = vpop.f32.mrf.mxu0
    %734 = vdwg.mxu0
    %v735 = vadd.f32 %v427, %v732
    %736 = vadd.xlane.f32.xlu0 %v735
    %v737 = vpop.xlane.xlu0 %736
    %v738 = vmul.f32 %v737, %v402
    %v739 = vmul.f32 %v735, %v735
    %740 = vadd.xlane.f32.xlu0 %v739
    %v741 = vpop.xlane.xlu0 %740
    %v742 = vmul.f32 %v741, %v402
    %v743 = vmul.f32 %v738, %v738
    %v744 = vsub.f32 %v742, %v743
    %v745 = vsub.f32 %v735, %v738
    %v746 = vadd.f32 %v744, 1e-05
    %v747 = vrsqrt.pop %v746
    %v748 = vmul.f32 %v745, %v747
    %v750 = vlaneseq
    %v751 = vshrl.u32 %v750, 7
    %v752 = vsub.s32 0, %v751
    %v753 = vrot.slane %v463, %v752
    %v755 = vmul.f32 %v748, %v753
    %v757 = vlaneseq
    %v758 = vshrl.u32 %v757, 7
    %v759 = vsub.s32 0, %v758
    %v760 = vrot.slane %v464, %v759
    %v762 = vadd.f32 %v755, %v760
    %763 = vst [vmem:[#allocation8] sm:$0xff] %v762
    %v764 = vcvt.s32.f32 %v313
    %v765 = vcvt.s32.f32 %v649
    %v766 = vadd.f32 %v320, %v656
    %v767 = vadd.f32 %v325, %v661
    %769 = vrot.lane.b32.xlu0 %v615, 16
    %v770 = vpop.permute.xlu0 %769
    %v772 = vsel %vm280, %v277, %v770
    %vm773 = vcmask 195584
    %v774 = vsel %vm773, %v772, %v764
    %vm775 = vcmask 203776
    %v776 = vsel %vm775, %v774, %v765
    %vm777 = vcmask 211968
    %v778 = vsel %vm777, %v776, %v766
    %vm779 = vcmask 220160
    %v780 = vsel %vm779, %v778, %v767
    %vm781 = vcmask 228352
    %v782 = vsel %vm781, %v780, 0.0
    %783 = vst [vmem:[%s16] sm:$0xff] %v782
    // Predicated region
    $region74: #{insert_decoder_forward.1} parent=1 // pred_check
      _
    $region75: #{insert_decoder_forward.1} parent=1 // pred_check_branch
      %785 = sbr.rel (0) target = $region77
    $region76: #{insert_decoder_forward.1} parent=1 // pred_region
      %s787 = ssub.s32 128, 128
      %788 = vsyncadd [#allocation4], %s787
      %s790 = sshll.u32 [#allocation8], 4
      %s791 = int_to_ptr.vmem [resolvable:$true] %s790
      %793 = dma.vmem_to_hbm [thread:$0]  %s791, 128, %s15, [#allocation4]
    $region77: #{insert_decoder_forward.1} parent=1 // pred_fallthru
      _
    // Predicated region
    $region78: #{insert_decoder_forward.1} parent=1 // pred_check
      _
    $region79: #{insert_decoder_forward.1} parent=1 // pred_check_branch
      %795 = sbr.rel (0) target = $region81
    $region80: #{insert_decoder_forward.1} parent=1 // pred_region
      _
    $region81: #{insert_decoder_forward.1} parent=1 // pred_fallthru
      _
    // Predicated region
    $region82: #{insert_decoder_forward.1} parent=1 // pred_check
      _
    $region83: #{insert_decoder_forward.1} parent=1 // pred_check_branch
      %797 = sbr.rel (0) target = $region85
    $region84: #{insert_decoder_forward.1} parent=1 // pred_region
      %798 = dma.done [#allocation4], 128
    $region85: #{insert_decoder_forward.1} parent=1 // pred_fallthru
      _
    // Predicated region
    $region86: #{insert_decoder_forward.1} parent=1 // pred_check
      _
    $region87: #{insert_decoder_forward.1} parent=1 // pred_check_branch
      %800 = sbr.rel (0) target = $region89
    $region88: #{insert_decoder_forward.1} parent=1 // pred_region
      _
    $region89: #{insert_decoder_forward.1} parent=1 // pred_fallthru
      _
    %801 = vsyncpa [#allocation3], 1
    %802 = vsyncpa [#allocation6], 1
    %803 = vsyncpa [#allocation4], 1

</llo_original>
